<compile_context>
chip_gen: v7x
topology: tpu7x:2x2x1
jax: 0.10.0
libtpu: 0.0.40
codegen_flags: <defaults>
</compile_context>

<pallas_src>
import jax
import jax.numpy as jnp
from jax.experimental import pallas as pl
from jax.experimental.pallas import tpu as pltpu


def _round_up(a: int, m: int) -> int:
    return (a + m - 1) // m * m


def _cdiv(a: int, b: int) -> int:
    return -(-a // b)


# ----------------------------------------------------------------------------
# Kernel
# ----------------------------------------------------------------------------
def highway_kernel(x_ref, w_ref, b_ref, out_ref):
    """Fused highway layers for one batch tile.

    x_ref  : (tb, Hp)         input activations (native dtype)
    w_ref  : (Lc, Hp, 2*Hp)   bf16, [transform | gate] concat on out dim, (in,out)
    b_ref  : (Lc, 1, 2*Hp)    f32 biases, same concatenation
    out_ref: (tb, Hp)         output activations
    """
    Hp = x_ref.shape[-1]
    x = x_ref[...].astype(jnp.float32)                   # f32 residual carry
    for l in range(w_ref.shape[0]):                      # static unroll, L small
        xb = x.astype(jnp.bfloat16)                      # bf16 MXU operands, f32 acc
        z = jnp.dot(xb, w_ref[l], preferred_element_type=jnp.float32) + b_ref[l]
        t = jnp.maximum(z[:, :Hp], 0.0)                  # ReLU(transform)   (VPU)
        g = pl.reciprocal(1.0 + jnp.exp(-z[:, Hp:]), approx=True)  # sigmoid (EUP)
        x = x + g * (t - x)                              # highway mix, f32
        # Padded lanes stay exactly 0: t_pad = 0, x_pad = 0 -> x + g*(0-0) = 0.
    out_ref[...] = x.astype(out_ref.dtype)


# ----------------------------------------------------------------------------
# One-time parameter prep (hoisted out of the per-call path)
# ----------------------------------------------------------------------------
def prep_highway_params(w_t, b_t, w_g, b_g):
    """PyTorch nn.Linear layout (L, out, in) / (L, out) -> fused kernel layout.

    Returns (w_cat (L, Hp, 2*Hp) bf16, b_cat (L, 1, 2*Hp) f32, H, Hp)."""
    L, H, _ = w_t.shape
    Hp = _round_up(H, 128)

    def pw(w):  # (L, out, in) -> (L, in, out), bf16, lane-padded
        w = jnp.transpose(w, (0, 2, 1)).astype(jnp.bfloat16)
        return jnp.pad(w, ((0, 0), (0, Hp - H), (0, Hp - H)))

    def pb(b):  # (L, H) -> (L, Hp), f32
        return jnp.pad(b.astype(jnp.float32), ((0, 0), (0, Hp - H)))

    w_cat = jnp.concatenate([pw(w_t), pw(w_g)], axis=-1)              # (L, Hp, 2Hp)
    b_cat = jnp.concatenate([pb(b_t), pb(b_g)], axis=-1).reshape(L, 1, 2 * Hp)
    return w_cat, b_cat, H, Hp


# ----------------------------------------------------------------------------
# pallas_call wrapper for one resident layer-chunk
# ----------------------------------------------------------------------------
def _highway_call(x2, w_cat, b_cat, tb, out_dtype, vmem_limit, use_buffered_weights):
    Bp, Hp = x2.shape
    Lc = w_cat.shape[0]
    grid = (Bp // tb,)

    def resident_spec(shape):
        zero_map = lambda i: (0,) * len(shape)
        if use_buffered_weights:
            # Constant index_map across the grid -> one buffer is enough.
            return pl.BlockSpec(shape, zero_map, pipeline_mode=pl.Buffered(1))
        return pl.BlockSpec(shape, zero_map)

    cost = pl.CostEstimate(
        flops=int(Bp) * Lc * (4 * Hp * Hp + 10 * Hp),
        transcendentals=int(Bp) * Lc * Hp,
        bytes_accessed=int(Bp) * Hp * (x2.dtype.itemsize + jnp.dtype(out_dtype).itemsize)
        + int(w_cat.size) * 2 + int(b_cat.size) * 4,
    )

    return pl.pallas_call(
        highway_kernel,
        out_shape=jax.ShapeDtypeStruct((Bp, Hp), out_dtype),
        grid=grid,
        in_specs=[
            pl.BlockSpec((tb, Hp), lambda i: (i, 0)),
            resident_spec((Lc, Hp, 2 * Hp)),
            resident_spec((Lc, 1, 2 * Hp)),
        ],
        out_specs=pl.BlockSpec((tb, Hp), lambda i: (i, 0)),
        compiler_params=pltpu.CompilerParams(
            dimension_semantics=("parallel",),
            vmem_limit_bytes=int(vmem_limit),
        ),
        cost_estimate=cost,
    )(x2, w_cat, b_cat)


# ----------------------------------------------------------------------------
# Forward
# ----------------------------------------------------------------------------
_VMEM_BUDGET = 48 * 1024 * 1024    # conservative: fits v7x's 64 MiB with headroom
_WEIGHT_BUDGET = 16 * 1024 * 1024  # resident bf16 weights per chunk (single copy)


def highway_forward(x, prepped, *, tb_max=512):
    """x: (..., H); prepped = prep_highway_params(...). Returns same shape/dtype."""
    w_cat, b_cat, H, Hp = prepped
    orig_shape, orig_dtype = x.shape, x.dtype
    L = w_cat.shape[0]

    x2 = x.reshape(-1, H)
    B = x2.shape[0]
    x_item = x2.dtype.itemsize
    o_item = jnp.dtype(orig_dtype).itemsize

    # --- VMEM residency guard: how many layers fit comfortably per chunk -----
    per_layer_w = Hp * 2 * Hp * 2 + 2 * Hp * 4            # bf16 weights + f32 bias
    layers_per_chunk = max(1, min(L, _WEIGHT_BUDGET // per_layer_w))
    w_bytes = layers_per_chunk * per_layer_w

    # --- batch tile: fit VMEM budget, >=2 grid steps, minimal padding --------
    # per-row bytes: double-buffered in/out tiles + f32 epilogue temporaries
    per_row = Hp * (2 * x_item + 2 * o_item + 40)
    avail = max(per_row, _VMEM_BUDGET - 2 * w_bytes - (2 << 20))
    tb_vmem = max(8, (avail // per_row) // 8 * 8)
    tb_cap = max(8, min(tb_max, tb_vmem))

    n_steps = max(1, _cdiv(B, tb_cap))
    if B > 8:
        n_steps = max(n_steps, 2)                         # use both v7x TensorCores
    tb = _round_up(_cdiv(B, n_steps), 8)
    B_pad = tb * n_steps

    # --- pad only when actually needed (minimize wrapper HBM traffic) --------
    if B_pad != B or Hp != H:
        x2 = jnp.pad(x2, ((0, B_pad - B), (0, Hp - H)))

    vmem_limit = min(
        2 * w_bytes                                        # weights (worst case 2-buf)
        + 2 * tb * Hp * (x_item + o_item)                  # double-buffered in/out tiles
        + 10 * tb * Hp * 4                                 # in-kernel f32 temporaries
        + (4 << 20),                                       # headroom
        100 * 1024 * 1024,
    )

    def run(use_buffered_weights):
        y = x2
        for l0 in range(0, L, layers_per_chunk):
            l1 = min(L, l0 + layers_per_chunk)
            # keep the residual carry f32 between chunks; emit caller dtype at end
            out_dt = orig_dtype if l1 == L else jnp.float32
            y = _highway_call(y, w_cat[l0:l1], b_cat[l0:l1], tb, out_dt,
                              vmem_limit, use_buffered_weights)
        return y

    try:
        out = run(hasattr(pl, "Buffered"))
    except Exception:  # older Pallas without Buffered(1) support for resident specs
        out = run(False)

    if B_pad != B or Hp != H:
        out = out[:B, :H]
    return out.reshape(orig_shape)


# ----------------------------------------------------------------------------
# Pure-JAX reference (matches the PyTorch module semantics)
# ----------------------------------------------------------------------------
def reference_forward(x, w_t, b_t, w_g, b_g):
    L = w_t.shape[0]
    y = x.astype(jnp.float32)
    for l in range(L):
        zg = jnp.dot(y, w_g[l].T, precision=jax.lax.Precision.HIGHEST) + b_g[l]
        zt = jnp.dot(y, w_t[l].T, precision=jax.lax.Precision.HIGHEST) + b_t[l]
        g = jax.nn.sigmoid(zg)
        t = jnp.maximum(zt, 0.0)
        y = g * t + (1.0 - g) * y
    return y


if __name__ == "__main__":
    # Small shapes consistent with the module: (batch, seq_len, hidden_size).
    N, S, H, L = 2, 8, 64, 2

    key = jax.random.PRNGKey(0)
    k_x, k_wt, k_bt, k_wg, k_bg = jax.random.split(key, 5)
    x = jax.random.normal(k_x, (N, S, H), dtype=jnp.float32)
    w_t = 0.05 * jax.random.normal(k_wt, (L, H, H), dtype=jnp.float32)  # (out, in)
    b_t = 0.05 * jax.random.normal(k_bt, (L, H), dtype=jnp.float32)
    w_g = 0.05 * jax.random.normal(k_wg, (L, H, H), dtype=jnp.float32)
    b_g = 0.05 * jax.random.normal(k_bg, (L, H), dtype=jnp.float32)

    prepped = prep_highway_params(w_t, b_t, w_g, b_g)   # one-time prep (hoisted)
    out = highway_forward(x, prepped)
    out = jax.block_until_ready(out)
    assert out.shape == (N, S, H), out.shape

    ref = reference_forward(x, w_t, b_t, w_g, b_g)
    max_err = float(jnp.max(jnp.abs(out - ref)))
    # bf16 MXU operands (f32 accumulation) + approx reciprocal -> bf16-class tol.
    assert jnp.allclose(out, ref, atol=3e-2, rtol=3e-2), (
        f"mismatch vs reference, max_err={max_err}")

    print("KERNEL_OK")
</pallas_src>

<mosaic_0001>
module attributes {stable_mosaic.version = 11 : i64} {
  func.func @highway_kernel(%arg0: i32, %arg1: memref<8x128xf32, #tpu.memory_space<vmem>>, %arg2: memref<2x128x256xbf16, #tpu.memory_space<vmem>>, %arg3: memref<2x1x256xf32, #tpu.memory_space<vmem>>, %arg4: memref<8x128xf32, #tpu.memory_space<vmem>>) attributes {dimension_semantics = [#tpu.dimension_semantics<parallel>], iteration_bounds = array<i64: 2>, scalar_prefetch = 0 : i64, scratch_operands = 0 : i64, tpu.core_type = #tpu.core_type<tc>, window_params = [{transform_indices = @transform_0, window_bounds = array<i64: 8, 128>}, {pipeline_mode = #tpu.pipeline_mode<synchronous>, transform_indices = @transform_1, window_bounds = array<i64: 2, 128, 256>}, {pipeline_mode = #tpu.pipeline_mode<synchronous>, transform_indices = @transform_2, window_bounds = array<i64: 2, 1, 256>}, {transform_indices = @transform_3, window_bounds = array<i64: 8, 128>}]} {
    %c0 = arith.constant 0 : index
    %c0_0 = arith.constant 0 : index
    %0 = vector.load %arg1[%c0, %c0_0] : memref<8x128xf32, #tpu.memory_space<vmem>>, vector<8x128xf32>
    %1 = arith.truncf %0 : vector<8x128xf32> to vector<8x128xbf16>
    %c0_1 = arith.constant 0 : index
    %c0_2 = arith.constant 0 : index
    %c0_3 = arith.constant 0 : index
    %2 = vector.load %arg2[%c0_1, %c0_2, %c0_3] : memref<2x128x256xbf16, #tpu.memory_space<vmem>>, vector<1x128x256xbf16>
    %3 = vector.shape_cast %2 : vector<1x128x256xbf16> to vector<128x256xbf16>
    %cst = arith.constant dense<0.000000e+00> : vector<8x256xf32>
    %4 = tpu.matmul %1, %3, %cst {dimension_numbers = #tpu.dot_dimension_numbers<[1], [0], [0], [1], [0, 0, 1, 1], [], []>} : vector<8x128xbf16>, vector<128x256xbf16>, vector<8x256xf32> -> vector<8x256xf32>
    %c0_4 = arith.constant 0 : index
    %c0_5 = arith.constant 0 : index
    %c0_6 = arith.constant 0 : index
    %5 = vector.load %arg3[%c0_4, %c0_5, %c0_6] : memref<2x1x256xf32, #tpu.memory_space<vmem>>, vector<1x1x256xf32>
    %6 = vector.shape_cast %5 : vector<1x1x256xf32> to vector<1x256xf32>
    %7 = vector.broadcast %6 : vector<1x256xf32> to vector<8x256xf32>
    %8 = arith.addf %4, %7 : vector<8x256xf32>
    %9 = vector.extract_strided_slice %8 {offsets = [0, 0], sizes = [8, 128], strides = [1, 1]} : vector<8x256xf32> to vector<8x128xf32>
    %cst_7 = arith.constant 0.000000e+00 : f32
    %10 = vector.broadcast %cst_7 : f32 to vector<8x128xf32>
    %11 = arith.maximumf %9, %10 : vector<8x128xf32>
    %12 = vector.extract_strided_slice %8 {offsets = [0, 128], sizes = [8, 128], strides = [1, 1]} : vector<8x256xf32> to vector<8x128xf32>
    %cst_8 = arith.constant 0.000000e+00 : f32
    %13 = vector.broadcast %cst_8 : f32 to vector<8x128xf32>
    %14 = arith.subf %13, %12 : vector<8x128xf32>
    %15 = math.exp %14 : vector<8x128xf32>
    %cst_9 = arith.constant 1.000000e+00 : f32
    %16 = vector.broadcast %cst_9 : f32 to vector<8x128xf32>
    %17 = arith.addf %16, %15 : vector<8x128xf32>
    %18 = tpu.reciprocal %17 {approx = true} : vector<8x128xf32> -> vector<8x128xf32>
    %19 = arith.subf %11, %0 : vector<8x128xf32>
    %20 = arith.mulf %18, %19 : vector<8x128xf32>
    %21 = arith.addf %0, %20 : vector<8x128xf32>
    %22 = arith.truncf %21 : vector<8x128xf32> to vector<8x128xbf16>
    %c1 = arith.constant 1 : index
    %c0_10 = arith.constant 0 : index
    %c0_11 = arith.constant 0 : index
    %23 = vector.load %arg2[%c1, %c0_10, %c0_11] : memref<2x128x256xbf16, #tpu.memory_space<vmem>>, vector<1x128x256xbf16>
    %24 = vector.shape_cast %23 : vector<1x128x256xbf16> to vector<128x256xbf16>
    %cst_12 = arith.constant dense<0.000000e+00> : vector<8x256xf32>
    %25 = tpu.matmul %22, %24, %cst_12 {dimension_numbers = #tpu.dot_dimension_numbers<[1], [0], [0], [1], [0, 0, 1, 1], [], []>} : vector<8x128xbf16>, vector<128x256xbf16>, vector<8x256xf32> -> vector<8x256xf32>
    %c1_13 = arith.constant 1 : index
    %c0_14 = arith.constant 0 : index
    %c0_15 = arith.constant 0 : index
    %26 = vector.load %arg3[%c1_13, %c0_14, %c0_15] : memref<2x1x256xf32, #tpu.memory_space<vmem>>, vector<1x1x256xf32>
    %27 = vector.shape_cast %26 : vector<1x1x256xf32> to vector<1x256xf32>
    %28 = vector.broadcast %27 : vector<1x256xf32> to vector<8x256xf32>
    %29 = arith.addf %25, %28 : vector<8x256xf32>
    %30 = vector.extract_strided_slice %29 {offsets = [0, 0], sizes = [8, 128], strides = [1, 1]} : vector<8x256xf32> to vector<8x128xf32>
    %cst_16 = arith.constant 0.000000e+00 : f32
    %31 = vector.broadcast %cst_16 : f32 to vector<8x128xf32>
    %32 = arith.maximumf %30, %31 : vector<8x128xf32>
    %33 = vector.extract_strided_slice %29 {offsets = [0, 128], sizes = [8, 128], strides = [1, 1]} : vector<8x256xf32> to vector<8x128xf32>
    %cst_17 = arith.constant 0.000000e+00 : f32
    %34 = vector.broadcast %cst_17 : f32 to vector<8x128xf32>
    %35 = arith.subf %34, %33 : vector<8x128xf32>
    %36 = math.exp %35 : vector<8x128xf32>
    %cst_18 = arith.constant 1.000000e+00 : f32
    %37 = vector.broadcast %cst_18 : f32 to vector<8x128xf32>
    %38 = arith.addf %37, %36 : vector<8x128xf32>
    %39 = tpu.reciprocal %38 {approx = true} : vector<8x128xf32> -> vector<8x128xf32>
    %40 = arith.subf %32, %21 : vector<8x128xf32>
    %41 = arith.mulf %39, %40 : vector<8x128xf32>
    %42 = arith.addf %21, %41 : vector<8x128xf32>
    %c0_19 = arith.constant 0 : index
    %c0_20 = arith.constant 0 : index
    %43 = vector.load %arg4[%c0_19, %c0_20] : memref<8x128xf32, #tpu.memory_space<vmem>>, vector<8x128xf32>
    tpu.vector_store %arg4[%c0_19, %c0_20], %42 {strides = array<i32>} : memref<8x128xf32, #tpu.memory_space<vmem>>, vector<8x128xf32>,
    return
  }
  func.func @transform_0(%arg0: i32) -> (i32, i32) {
    %c0_i32 = arith.constant 0 : i32
    %c0_i32_0 = arith.constant 0 : i32
    return %arg0, %c0_i32 : i32, i32
  }
  func.func @transform_1(%arg0: i32) -> (i32, i32, i32) {
    %c0_i32 = arith.constant 0 : i32
    %c0_i32_0 = arith.constant 0 : i32
    %c0_i32_1 = arith.constant 0 : i32
    %c0_i32_2 = arith.constant 0 : i32
    return %c0_i32, %c0_i32_0, %c0_i32_1 : i32, i32, i32
  }
  func.func @transform_2(%arg0: i32) -> (i32, i32, i32) {
    %c0_i32 = arith.constant 0 : i32
    %c0_i32_0 = arith.constant 0 : i32
    %c0_i32_1 = arith.constant 0 : i32
    %c0_i32_2 = arith.constant 0 : i32
    return %c0_i32, %c0_i32_0, %c0_i32_1 : i32, i32, i32
  }
  func.func @transform_3(%arg0: i32) -> (i32, i32) {
    %c0_i32 = arith.constant 0 : i32
    %c0_i32_0 = arith.constant 0 : i32
    return %arg0, %c0_i32 : i32, i32
  }
}

module attributes {stable_mosaic.version = 11 : i64} {
  func.func @highway_kernel(%arg0: i32, %arg1: memref<8x128xf32, #tpu.memory_space<vmem>>, %arg2: memref<2x128x256xbf16, #tpu.memory_space<vmem>>, %arg3: memref<2x1x256xf32, #tpu.memory_space<vmem>>, %arg4: memref<8x128xf32, #tpu.memory_space<vmem>>) attributes {dimension_semantics = [#tpu.dimension_semantics<parallel>], iteration_bounds = array<i64: 2>, scalar_prefetch = 0 : i64, scratch_operands = 0 : i64, tpu.core_type = #tpu.core_type<tc>, window_params = [{transform_indices = @transform_0, window_bounds = array<i64: 8, 128>}, {pipeline_mode = #tpu.pipeline_mode<synchronous>, transform_indices = @transform_1, window_bounds = array<i64: 2, 128, 256>}, {pipeline_mode = #tpu.pipeline_mode<synchronous>, transform_indices = @transform_2, window_bounds = array<i64: 2, 1, 256>}, {transform_indices = @transform_3, window_bounds = array<i64: 8, 128>}]} {
    %c0 = arith.constant 0 : index
    %c0_0 = arith.constant 0 : index
    %0 = vector.load %arg1[%c0, %c0_0] : memref<8x128xf32, #tpu.memory_space<vmem>>, vector<8x128xf32>
    %1 = arith.truncf %0 : vector<8x128xf32> to vector<8x128xbf16>
    %c0_1 = arith.constant 0 : index
    %c0_2 = arith.constant 0 : index
    %c0_3 = arith.constant 0 : index
    %2 = vector.load %arg2[%c0_1, %c0_2, %c0_3] : memref<2x128x256xbf16, #tpu.memory_space<vmem>>, vector<1x128x256xbf16>
    %3 = vector.shape_cast %2 : vector<1x128x256xbf16> to vector<128x256xbf16>
    %cst = arith.constant dense<0.000000e+00> : vector<8x256xf32>
    %4 = tpu.matmul %1, %3, %cst {dimension_numbers = #tpu.dot_dimension_numbers<[1], [0], [0], [1], [0, 0, 1, 1], [], []>} : vector<8x128xbf16>, vector<128x256xbf16>, vector<8x256xf32> -> vector<8x256xf32>
    %c0_4 = arith.constant 0 : index
    %c0_5 = arith.constant 0 : index
    %c0_6 = arith.constant 0 : index
    %5 = vector.load %arg3[%c0_4, %c0_5, %c0_6] : memref<2x1x256xf32, #tpu.memory_space<vmem>>, vector<1x1x256xf32>
    %6 = vector.shape_cast %5 : vector<1x1x256xf32> to vector<1x256xf32>
    %7 = vector.broadcast %6 : vector<1x256xf32> to vector<8x256xf32>
    %8 = arith.addf %4, %7 : vector<8x256xf32>
    %9 = vector.extract_strided_slice %8 {offsets = [0, 0], sizes = [8, 128], strides = [1, 1]} : vector<8x256xf32> to vector<8x128xf32>
    %cst_7 = arith.constant 0.000000e+00 : f32
    %10 = vector.broadcast %cst_7 : f32 to vector<8x128xf32>
    %11 = arith.maximumf %9, %10 : vector<8x128xf32>
    %12 = vector.extract_strided_slice %8 {offsets = [0, 128], sizes = [8, 128], strides = [1, 1]} : vector<8x256xf32> to vector<8x128xf32>
    %cst_8 = arith.constant 0.000000e+00 : f32
    %13 = vector.broadcast %cst_8 : f32 to vector<8x128xf32>
    %14 = arith.subf %13, %12 : vector<8x128xf32>
    %15 = math.exp %14 : vector<8x128xf32>
    %cst_9 = arith.constant 1.000000e+00 : f32
    %16 = vector.broadcast %cst_9 : f32 to vector<8x128xf32>
    %17 = arith.addf %16, %15 : vector<8x128xf32>
    %18 = tpu.reciprocal %17 {approx = true} : vector<8x128xf32> -> vector<8x128xf32>
    %19 = arith.subf %11, %0 : vector<8x128xf32>
    %20 = arith.mulf %18, %19 : vector<8x128xf32>
    %21 = arith.addf %0, %20 : vector<8x128xf32>
    %22 = arith.truncf %21 : vector<8x128xf32> to vector<8x128xbf16>
    %c1 = arith.constant 1 : index
    %c0_10 = arith.constant 0 : index
    %c0_11 = arith.constant 0 : index
    %23 = vector.load %arg2[%c1, %c0_10, %c0_11] : memref<2x128x256xbf16, #tpu.memory_space<vmem>>, vector<1x128x256xbf16>
    %24 = vector.shape_cast %23 : vector<1x128x256xbf16> to vector<128x256xbf16>
    %cst_12 = arith.constant dense<0.000000e+00> : vector<8x256xf32>
    %25 = tpu.matmul %22, %24, %cst_12 {dimension_numbers = #tpu.dot_dimension_numbers<[1], [0], [0], [1], [0, 0, 1, 1], [], []>} : vector<8x128xbf16>, vector<128x256xbf16>, vector<8x256xf32> -> vector<8x256xf32>
    %c1_13 = arith.constant 1 : index
    %c0_14 = arith.constant 0 : index
    %c0_15 = arith.constant 0 : index
    %26 = vector.load %arg3[%c1_13, %c0_14, %c0_15] : memref<2x1x256xf32, #tpu.memory_space<vmem>>, vector<1x1x256xf32>
    %27 = vector.shape_cast %26 : vector<1x1x256xf32> to vector<1x256xf32>
    %28 = vector.broadcast %27 : vector<1x256xf32> to vector<8x256xf32>
    %29 = arith.addf %25, %28 : vector<8x256xf32>
    %30 = vector.extract_strided_slice %29 {offsets = [0, 0], sizes = [8, 128], strides = [1, 1]} : vector<8x256xf32> to vector<8x128xf32>
    %cst_16 = arith.constant 0.000000e+00 : f32
    %31 = vector.broadcast %cst_16 : f32 to vector<8x128xf32>
    %32 = arith.maximumf %30, %31 : vector<8x128xf32>
    %33 = vector.extract_strided_slice %29 {offsets = [0, 128], sizes = [8, 128], strides = [1, 1]} : vector<8x256xf32> to vector<8x128xf32>
    %cst_17 = arith.constant 0.000000e+00 : f32
    %34 = vector.broadcast %cst_17 : f32 to vector<8x128xf32>
    %35 = arith.subf %34, %33 : vector<8x128xf32>
    %36 = math.exp %35 : vector<8x128xf32>
    %cst_18 = arith.constant 1.000000e+00 : f32
    %37 = vector.broadcast %cst_18 : f32 to vector<8x128xf32>
    %38 = arith.addf %37, %36 : vector<8x128xf32>
    %39 = tpu.reciprocal %38 {approx = true} : vector<8x128xf32> -> vector<8x128xf32>
    %40 = arith.subf %32, %21 : vector<8x128xf32>
    %41 = arith.mulf %39, %40 : vector<8x128xf32>
    %42 = arith.addf %21, %41 : vector<8x128xf32>
    %c0_19 = arith.constant 0 : index
    %c0_20 = arith.constant 0 : index
    %43 = vector.load %arg4[%c0_19, %c0_20] : memref<8x128xf32, #tpu.memory_space<vmem>>, vector<8x128xf32>
    tpu.vector_store %arg4[%c0_19, %c0_20], %42 {strides = array<i32>} : memref<8x128xf32, #tpu.memory_space<vmem>>, vector<8x128xf32>,
    return
  }
  func.func @transform_0(%arg0: i32) -> (i32, i32) {
    %c0_i32 = arith.constant 0 : i32
    %c0_i32_0 = arith.constant 0 : i32
    return %arg0, %c0_i32 : i32, i32
  }
  func.func @transform_1(%arg0: i32) -> (i32, i32, i32) {
    %c0_i32 = arith.constant 0 : i32
    %c0_i32_0 = arith.constant 0 : i32
    %c0_i32_1 = arith.constant 0 : i32
    %c0_i32_2 = arith.constant 0 : i32
    return %c0_i32, %c0_i32_0, %c0_i32_1 : i32, i32, i32
  }
  func.func @transform_2(%arg0: i32) -> (i32, i32, i32) {
    %c0_i32 = arith.constant 0 : i32
    %c0_i32_0 = arith.constant 0 : i32
    %c0_i32_1 = arith.constant 0 : i32
    %c0_i32_2 = arith.constant 0 : i32
    return %c0_i32, %c0_i32_0, %c0_i32_1 : i32, i32, i32
  }
  func.func @transform_3(%arg0: i32) -> (i32, i32) {
    %c0_i32 = arith.constant 0 : i32
    %c0_i32_0 = arith.constant 0 : i32
    return %arg0, %c0_i32 : i32, i32
  }
}

</mosaic_0001>

<llo_original>
// kernel: tpu_custom_call.1
$region0: #{tpu_custom_call.1}
  #allocation0 [shape = 'u32[]', space=smem, size = 0x4, offset = 0x4, fixed_abs, tag = 'smem constant byte address 0x4 - core index']
  #allocation1 [shape = 'u32[144,128]{1,0:T(1,128)}', space=vmem, size = 0x12000, scoped, tag = 'internal scratch']
  %s0 = inlined_call_operand.hbm [shape: f32[16,128], index: 0, kind: input, shape index: {}]
  %s1 = inlined_call_operand.hbm [shape: bf16[2,128,256], index: 1, kind: input, shape index: {}]
  %s2 = inlined_call_operand.vmem [shape: f32[2,1,256], index: 2, kind: input, shape index: {}]
  %s3 = inlined_call_operand.hbm [shape: f32[16,128], index: 3, kind: output, shape index: {}]
  %s4 = sld [smem:[#allocation0]]
  $region53: #{tpu_custom_call.1} parent=0
    _
  %s6 = ssub.s32 1, %s4
  %s7 = scalar_select 0, %s6, %s4
  $region1: #{tpu_custom_call.1} parent=0
    #allocation2 [shape = 'u8[8192]{0}', space=vmem, size = 0x2000, scoped, tag = 'input window, operand 0']
    #allocation3 [shape = 's32[2]{0}', space=sflag, size = 0x8, scoped, tag = 'scoped memory for tpu_custom_call.1']
    #allocation4 [shape = 's32[2]{0}', space=sflag, size = 0x8, scoped, tag = 'scoped memory for tpu_custom_call.1']
    #allocation5 [shape = 'u8[131072]{0}', space=vmem, size = 0x20000, scoped, tag = 'input window, operand 1, single buffered']
    #allocation6 [shape = 's32[1]{0}', space=sflag, size = 0x4, scoped, tag = 'scoped memory for tpu_custom_call.1']
    #allocation7 [shape = 'u8[8192]{0}', space=vmem, size = 0x2000, scoped, tag = 'output window, operand 0']
    %8 = vsyncpa [#allocation3], 0
    %s9 = scalar_lea.sflag [#allocation3], 1
    %10 = vsyncpa %s9, 0
    %11 = vsyncpa [#allocation6], 0
    %12 = vsyncpa [#allocation4], 0
    %s13 = scalar_lea.sflag [#allocation4], 1
    %14 = vsyncpa %s13, 0
    loop: start=0, step=1, limit=4
    $region2: #{tpu_custom_call.1} parent=1 // loop_pre_header
      _
    $region3: #{tpu_custom_call.1} parent=1 // loop_header
      %s16 = sphi 0, %s20
      %p17 = scmp.ge.s32.totalorder %s16, 4
      %s26 = sphi 0, %s28
      %s29 = sphi 0, %s26
      %s30 = sphi 0, %s29
      %s46 = sphi 0, %s30
      %s50 = sphi 0, %s50
      %s52 = sphi 0, %s50
      %s53 = sphi 0, %s52
      %s67 = sphi 0, %s53
      %s71 = sphi 0, %s71
      %s73 = sphi 0, %s71
      %s74 = sphi 0, %s73
      %s88 = sphi 0, %s74
      %s94 = sphi 0, %s96
      %s97 = sphi 0, %s94
      %s98 = sphi 0, %s97
      %s114 = sphi 0, %s98
    $region4: #{tpu_custom_call.1} parent=1 // loop_header_branch
      %19 = sbr.rel (%p17) target = $region8
    $region5: #{tpu_custom_call.1} parent=1 // loop_body
      %s21 = ssub.s32 %s16, 1
      %s22 = ssub.s32 %s16, 2
      %s23 = sadd.s32 %s16, 1
      %s24 = ssub.s32 %s16, %s23
      %p25 = scmp.eq.s32.totalorder %s24, 0
      %s27 = sadd.s32 %s26, 1
      %s28 = scalar_select %p25, %s26, %s27
      %p31 = pneg %p25
      %p32 = scmp.eq.s32.totalorder %s16, 1
      %p33 = por %p31, %p32
      %p34 = scmp.ne.s32.totalorder %s26, %s29
      %p35 = scmp.eq.s32.totalorder %s16, 0
      %p36 = por %p34, %p35
      %p37 = scmp.ne.s32.totalorder %s26, %s29
      %p38 = scmp.eq.s32.totalorder %s21, 1
      %p39 = por %p37, %p38
      %p40 = scmp.ne.s32.totalorder %s29, %s30
      %p41 = scmp.eq.s32.totalorder %s21, 0
      %p42 = por %p40, %p41
      %p43 = scmp.ne.s32.totalorder %s29, %s30
      %p44 = scmp.eq.s32.totalorder %s22, 1
      %p45 = por %p43, %p44
      %p47 = scmp.ne.s32.totalorder %s30, %s46
      %p48 = scmp.eq.s32.totalorder %s22, 0
      %p49 = por %p47, %p48
      %s51 = sadd.s32 %s50, 1
      %p54 = scmp.eq.s32.totalorder %s16, 1
      %p55 = scmp.ne.s32.totalorder %s50, %s52
      %p56 = scmp.eq.s32.totalorder %s16, 0
      %p57 = por %p55, %p56
      %p58 = scmp.ne.s32.totalorder %s50, %s52
      %p59 = scmp.eq.s32.totalorder %s21, 1
      %p60 = por %p58, %p59
      %p61 = scmp.ne.s32.totalorder %s52, %s53
      %p62 = scmp.eq.s32.totalorder %s21, 0
      %p63 = por %p61, %p62
      %p64 = scmp.ne.s32.totalorder %s52, %s53
      %p65 = scmp.eq.s32.totalorder %s22, 1
      %p66 = por %p64, %p65
      %p68 = scmp.ne.s32.totalorder %s53, %s67
      %p69 = scmp.eq.s32.totalorder %s22, 0
      %p70 = por %p68, %p69
      %s72 = sadd.s32 %s71, 1
      %p75 = scmp.eq.s32.totalorder %s16, 1
      %p76 = scmp.ne.s32.totalorder %s71, %s73
      %p77 = scmp.eq.s32.totalorder %s16, 0
      %p78 = por %p76, %p77
      %p79 = scmp.ne.s32.totalorder %s71, %s73
      %p80 = scmp.eq.s32.totalorder %s21, 1
      %p81 = por %p79, %p80
      %p82 = scmp.ne.s32.totalorder %s73, %s74
      %p83 = scmp.eq.s32.totalorder %s21, 0
      %p84 = por %p82, %p83
      %p85 = scmp.ne.s32.totalorder %s73, %s74
      %p86 = scmp.eq.s32.totalorder %s22, 1
      %p87 = por %p85, %p86
      %p89 = scmp.ne.s32.totalorder %s74, %s88
      %p90 = scmp.eq.s32.totalorder %s22, 0
      %p91 = por %p89, %p90
      %s92 = ssub.s32 %s16, %s23
      %p93 = scmp.eq.s32.totalorder %s92, 0
      %s95 = sadd.s32 %s94, 1
      %s96 = scalar_select %p93, %s94, %s95
      %p99 = pneg %p93
      %p100 = scmp.eq.s32.totalorder %s16, 1
      %p101 = por %p99, %p100
      %p102 = scmp.ne.s32.totalorder %s94, %s97
      %p103 = scmp.eq.s32.totalorder %s16, 0
      %p104 = por %p102, %p103
      %p105 = scmp.ne.s32.totalorder %s94, %s97
      %p106 = scmp.eq.s32.totalorder %s21, 1
      %p107 = por %p105, %p106
      %p108 = scmp.ne.s32.totalorder %s97, %s98
      %p109 = scmp.eq.s32.totalorder %s21, 0
      %p110 = por %p108, %p109
      %p111 = scmp.ne.s32.totalorder %s97, %s98
      %p112 = scmp.eq.s32.totalorder %s22, 1
      %p113 = por %p111, %p112
      %p115 = scmp.ne.s32.totalorder %s98, %s114
      %p116 = scmp.eq.s32.totalorder %s22, 0
      %p117 = por %p115, %p116
      %p118 = scmp.le.s32.totalorder 1, %s16
      %p119 = scmp.lt.s32.totalorder %s16, 3
      %p120 = pnand %p118, %p119
      %p121 = pneg %p120
      // Predicated region
      $region9: #{tpu_custom_call.1} parent=5 // pred_check
        _
      $region10: #{tpu_custom_call.1} parent=5 // pred_check_branch
        %123 = sbr.rel (%p120) target = $region12
      $region11: #{tpu_custom_call.1} parent=5 // pred_region
        %s124 = ssub.s32 %s16, 1
        // Predicated region
        $region13: #{tpu_custom_call.1} parent=11 // pred_check
          %p125 = pneg %p63
        $region14: #{tpu_custom_call.1} parent=11 // pred_check_branch
          %127 = sbr.rel (%p125) target = $region16
        $region15: #{tpu_custom_call.1} parent=11 // pred_region
          %s129 = ssub.s32 4096, 4096
          %130 = vsyncadd [#allocation6], %s129
          %s131 = sshll.u32 [#allocation5], 4
          %s132 = int_to_ptr.vmem [resolvable:$true] %s131
          %137 = dma.hbm_to_vmem [thread:$0]  %s1, 4096, %s132, [#allocation6], 128, 128, 8
        $region16: #{tpu_custom_call.1} parent=11 // pred_fallthru
          _
        // Predicated region
        $region17: #{tpu_custom_call.1} parent=11 // pred_check
          %p138 = pneg %p84
        $region18: #{tpu_custom_call.1} parent=11 // pred_check_branch
          %140 = sbr.rel (%p138) target = $region20
        $region19: #{tpu_custom_call.1} parent=11 // pred_region
          _
        $region20: #{tpu_custom_call.1} parent=11 // pred_fallthru
          _
      $region12: #{tpu_custom_call.1} parent=5 // pred_fallthru
        _
      %p141 = scmp.lt.s32.totalorder %s16, 2
      // Predicated region
      $region21: #{tpu_custom_call.1} parent=5 // pred_check
        %p142 = pneg %p141
      $region22: #{tpu_custom_call.1} parent=5 // pred_check_branch
        %144 = sbr.rel (%p142) target = $region24
      $region23: #{tpu_custom_call.1} parent=5 // pred_region
        // Predicated region
        $region25: #{tpu_custom_call.1} parent=23 // pred_check
          %p145 = pneg %p36
        $region26: #{tpu_custom_call.1} parent=23 // pred_check_branch
          %147 = sbr.rel (%p145) target = $region28
        $region27: #{tpu_custom_call.1} parent=23 // pred_region
          %s148 = sand.u32 %s26, 1
          %s149 = scalar_lea.sflag [#allocation3], %s148
          %s150 = sand.u32 %s26, 1
          %s151 = smul.addr %s150, 8
          %s152 = scalar_lea.vmem [#allocation2], %s151
          %s154 = ssub.s32 128, 128
          %155 = vsyncadd %s149, %s154
          %s156 = smul.addr %s16, 128
          %s157 = scalar_lea.hbm %s0, %s156
          %s159 = sshll.u32 %s152, 4
          %s160 = int_to_ptr.vmem [resolvable:$true] %s159
          %162 = dma.hbm_to_vmem [thread:$0]  %s157, 128, %s160, %s149
        $region28: #{tpu_custom_call.1} parent=23 // pred_fallthru
          _
      $region24: #{tpu_custom_call.1} parent=5 // pred_fallthru
        _
      %p163 = scmp.le.s32.totalorder 1, %s16
      %p164 = scmp.lt.s32.totalorder %s16, 3
      %p165 = pnand %p163, %p164
      %p166 = pneg %p165
      // Predicated region
      $region29: #{tpu_custom_call.1} parent=5 // pred_check
        _
      $region30: #{tpu_custom_call.1} parent=5 // pred_check_branch
        %168 = sbr.rel (%p165) target = $region32
      $region31: #{tpu_custom_call.1} parent=5 // pred_region
        %s169 = ssub.s32 %s16, 1
        %s170 = sand.u32 %s29, 1
        %s171 = scalar_lea.sflag [#allocation3], %s170
        %s172 = sand.u32 %s29, 1
        %s173 = smul.addr %s172, 8
        %s174 = scalar_lea.vmem [#allocation2], %s173
        // Predicated region
        $region33: #{tpu_custom_call.1} parent=31 // pred_check
          %p175 = pneg %p42
        $region34: #{tpu_custom_call.1} parent=31 // pred_check_branch
          %177 = sbr.rel (%p175) target = $region36
        $region35: #{tpu_custom_call.1} parent=31 // pred_region
          %178 = dma.done %s171, 128
        $region36: #{tpu_custom_call.1} parent=31 // pred_fallthru
          _
        // Predicated region
        $region37: #{tpu_custom_call.1} parent=31 // pred_check
          %p179 = pneg %p63
        $region38: #{tpu_custom_call.1} parent=31 // pred_check_branch
          %181 = sbr.rel (%p179) target = $region40
        $region39: #{tpu_custom_call.1} parent=31 // pred_region
          %182 = dma.done [#allocation6], 4096
        $region40: #{tpu_custom_call.1} parent=31 // pred_fallthru
          _
        %s183 = sand.u32 %s29, 1
        %s184 = scalar_lea.sflag [#allocation3], %s183
        %s185 = sand.u32 %s29, 1
        %s186 = smul.addr %s185, 8
        %s187 = scalar_lea.vmem [#allocation2], %s186
        %p188 = pneg %p42
        %p189 = pneg %p39
        %p190 = pneg %p63
        %p191 = pneg %p60
        %p192 = pneg %p84
        %p193 = pneg %p81
        %p194 = pneg %p110
        %p195 = pneg %p107
        %s196 = sand.u32 %s97, 1
        %s197 = scalar_lea.sflag [#allocation4], %s196
        %s198 = sand.u32 %s97, 1
        %s199 = smul.addr %s198, 8
        %s200 = scalar_lea.vmem [#allocation7], %s199
        %v202 = vld [vmem:[%s174] sm:$0xff]
        %v203 = vpack.c.bf16 %v202, %v202
        %v204 = vld [vmem:[#allocation5] sm:$0xff]
        %v205 = vld [vmem:[#allocation5 + $0x8] sm:$0xff]
        %v206 = vld [vmem:[#allocation5 + $0x10] sm:$0xff]
        %v207 = vld [vmem:[#allocation5 + $0x18] sm:$0xff]
        %v208 = vld [vmem:[#allocation5 + $0x20] sm:$0xff]
        %v209 = vld [vmem:[#allocation5 + $0x28] sm:$0xff]
        %v210 = vld [vmem:[#allocation5 + $0x30] sm:$0xff]
        %v211 = vld [vmem:[#allocation5 + $0x38] sm:$0xff]
        %v212 = vld [vmem:[#allocation5 + $0x40] sm:$0xff]
        %v213 = vld [vmem:[#allocation5 + $0x48] sm:$0xff]
        %v214 = vld [vmem:[#allocation5 + $0x50] sm:$0xff]
        %v215 = vld [vmem:[#allocation5 + $0x58] sm:$0xff]
        %v216 = vld [vmem:[#allocation5 + $0x60] sm:$0xff]
        %v217 = vld [vmem:[#allocation5 + $0x68] sm:$0xff]
        %v218 = vld [vmem:[#allocation5 + $0x70] sm:$0xff]
        %v219 = vld [vmem:[#allocation5 + $0x78] sm:$0xff]
        %v220 = vld [vmem:[%s2] sm:$0x3]
        %v222 = vlaneseq
        %v223 = vshrl.u32 %v222, 7
        %v224 = vsub.s32 0, %v223
        %v225 = vrot.slane %v220, %v224
        %v226 = vlaneseq
        %v227 = vshrl.u32 %v226, 7
        %v228 = vsub.s32 1, %v227
        %v229 = vrot.slane %v220, %v228
        %v248 = vunpack.c.l.b16 %v204
        %v249 = vunpack.c.h.b16 %v204
        %v250 = vunpack.c.l.b16 %v205
        %v251 = vunpack.c.h.b16 %v205
        %v252 = vunpack.c.l.b16 %v206
        %v253 = vunpack.c.h.b16 %v206
        %v254 = vunpack.c.l.b16 %v207
        %v255 = vunpack.c.h.b16 %v207
        %v256 = vunpack.c.l.b16 %v208
        %v257 = vunpack.c.h.b16 %v208
        %v258 = vunpack.c.l.b16 %v209
        %v259 = vunpack.c.h.b16 %v209
        %v260 = vunpack.c.l.b16 %v210
        %v261 = vunpack.c.h.b16 %v210
        %v262 = vunpack.c.l.b16 %v211
        %v263 = vunpack.c.h.b16 %v211
        %v264 = vunpack.c.l.b16 %v212
        %v265 = vunpack.c.h.b16 %v212
        %v266 = vunpack.c.l.b16 %v213
        %v267 = vunpack.c.h.b16 %v213
        %v268 = vunpack.c.l.b16 %v214
        %v269 = vunpack.c.h.b16 %v214
        %v270 = vunpack.c.l.b16 %v215
        %v271 = vunpack.c.h.b16 %v215
        %v272 = vunpack.c.l.b16 %v216
        %v273 = vunpack.c.h.b16 %v216
        %v274 = vunpack.c.l.b16 %v217
        %v275 = vunpack.c.h.b16 %v217
        %v276 = vunpack.c.l.b16 %v218
        %v277 = vunpack.c.h.b16 %v218
        %v278 = vunpack.c.l.b16 %v219
        %v279 = vunpack.c.h.b16 %v219
        %v280 = vpack.c.b16 %v250, %v248
        %v281 = vpack.c.b16 %v251, %v249
        %v282 = vpack.c.b16 %v254, %v252
        %v283 = vpack.c.b16 %v255, %v253
        %v284 = vpack.c.b16 %v258, %v256
        %v285 = vpack.c.b16 %v259, %v257
        %v286 = vpack.c.b16 %v262, %v260
        %v287 = vpack.c.b16 %v263, %v261
        %v288 = vpack.c.b16 %v266, %v264
        %v289 = vpack.c.b16 %v267, %v265
        %v290 = vpack.c.b16 %v270, %v268
        %v291 = vpack.c.b16 %v271, %v269
        %v292 = vpack.c.b16 %v274, %v272
        %v293 = vpack.c.b16 %v275, %v273
        %v294 = vpack.c.b16 %v278, %v276
        %v295 = vpack.c.b16 %v279, %v277
        %312 = vmatprep.subr.bf16.mxu0 %v281
        %313 = vmatpush1.bf16.msra.mxu0 %v280
        %314 = vmatprep.subr.bf16.mxu0 %v283
        %315 = vmatpush1.bf16.msra.mxu0 %v282
        %316 = vmatprep.subr.bf16.mxu0 %v285
        %317 = vmatpush1.bf16.msra.mxu0 %v284
        %318 = vmatprep.subr.bf16.mxu0 %v287
        %319 = vmatpush1.bf16.msra.mxu0 %v286
        %320 = vmatprep.subr.bf16.mxu0 %v289
        %321 = vmatpush1.bf16.msra.mxu0 %v288
        %322 = vmatprep.subr.bf16.mxu0 %v291
        %323 = vmatpush1.bf16.msra.mxu0 %v290
        %324 = vmatprep.subr.bf16.mxu0 %v293
        %325 = vmatpush1.bf16.msra.mxu0 %v292
        %326 = vmatprep.subr.bf16.mxu0 %v295
        %327 = vmatpush1.bf16.msra.mxu0 %v294
        %328 = vmatprep.subr.bf16.mxu0 0
        %329 = vmatpush1.bf16.msra.mxu0 0
        %330 = vmatprep.subr.bf16.mxu0 0
        %331 = vmatpush1.bf16.msra.mxu0 0
        %332 = vmatprep.subr.bf16.mxu0 0
        %333 = vmatpush1.bf16.msra.mxu0 0
        %334 = vmatprep.subr.bf16.mxu0 0
        %335 = vmatpush1.bf16.msra.mxu0 0
        %336 = vmatprep.subr.bf16.mxu0 0
        %337 = vmatpush1.bf16.msra.mxu0 0
        %338 = vmatprep.subr.bf16.mxu0 0
        %339 = vmatpush1.bf16.msra.mxu0 0
        %340 = vmatprep.subr.bf16.mxu0 0
        %341 = vmatpush1.bf16.msra.mxu0 0
        %342 = vmatprep.subr.bf16.mxu0 0
        %343 = vmatpush1.bf16.msra.mxu0 0
        %344 = vmatprep.mubr.bf16.mxu0 0
        %345 = vmatmul.mubr.bf16.gmra.mrb[0].mxu0 %v203
        %v346 = vpop.f32.mrb[0].mxu0
        %v347 = vadd.f32 %v225, %v346
        %v348 = vpop.f32.mrb[0].mxu0
        %v349 = vadd.f32 %v229, %v348
        %v350 = vpop.f32.mrb[0].mxu0
        %v351 = vpop.f32.mrb[0].mxu0
        %352 = vdwg.mxu0
        %v353 = vmax.f32 %v347, 0.0
        %v354 = vsub.f32 0.0, %v349
        %v355 = vmul.f32 %v354, 1.442695
        %v356 = vpow.pop %v355
        %v357 = vadd.f32 %v356, 1.0
        %v358 = vrcp.pop %v357
        %v359 = vsub.f32 %v353, %v202
        %v360 = vmul.f32 %v358, %v359
        %v361 = vadd.f32 %v202, %v360
        %v362 = vpack.c.bf16 %v361, %v361
        %s363 = scalar_lea.vmem [#allocation5], 128
        %v364 = vld [vmem:[%s363] sm:$0xff]
        %v365 = vld [vmem:[%s363 + $0x8] sm:$0xff]
        %v366 = vld [vmem:[%s363 + $0x10] sm:$0xff]
        %v367 = vld [vmem:[%s363 + $0x18] sm:$0xff]
        %v368 = vld [vmem:[%s363 + $0x20] sm:$0xff]
        %v369 = vld [vmem:[%s363 + $0x28] sm:$0xff]
        %v370 = vld [vmem:[%s363 + $0x30] sm:$0xff]
        %v371 = vld [vmem:[%s363 + $0x38] sm:$0xff]
        %v372 = vld [vmem:[%s363 + $0x40] sm:$0xff]
        %v373 = vld [vmem:[%s363 + $0x48] sm:$0xff]
        %v374 = vld [vmem:[%s363 + $0x50] sm:$0xff]
        %v375 = vld [vmem:[%s363 + $0x58] sm:$0xff]
        %v376 = vld [vmem:[%s363 + $0x60] sm:$0xff]
        %v377 = vld [vmem:[%s363 + $0x68] sm:$0xff]
        %v378 = vld [vmem:[%s363 + $0x70] sm:$0xff]
        %v379 = vld [vmem:[%s363 + $0x78] sm:$0xff]
        %s380 = scalar_lea.vmem %s2, 2
        %v381 = vld [vmem:[%s380] sm:$0x3]
        %v383 = vlaneseq
        %v384 = vshrl.u32 %v383, 7
        %v385 = vsub.s32 0, %v384
        %v386 = vrot.slane %v381, %v385
        %v387 = vlaneseq
        %v388 = vshrl.u32 %v387, 7
        %v389 = vsub.s32 1, %v388
        %v390 = vrot.slane %v381, %v389
        %v409 = vunpack.c.l.b16 %v364
        %v410 = vunpack.c.h.b16 %v364
        %v411 = vunpack.c.l.b16 %v365
        %v412 = vunpack.c.h.b16 %v365
        %v413 = vunpack.c.l.b16 %v366
        %v414 = vunpack.c.h.b16 %v366
        %v415 = vunpack.c.l.b16 %v367
        %v416 = vunpack.c.h.b16 %v367
        %v417 = vunpack.c.l.b16 %v368
        %v418 = vunpack.c.h.b16 %v368
        %v419 = vunpack.c.l.b16 %v369
        %v420 = vunpack.c.h.b16 %v369
        %v421 = vunpack.c.l.b16 %v370
        %v422 = vunpack.c.h.b16 %v370
        %v423 = vunpack.c.l.b16 %v371
        %v424 = vunpack.c.h.b16 %v371
        %v425 = vunpack.c.l.b16 %v372
        %v426 = vunpack.c.h.b16 %v372
        %v427 = vunpack.c.l.b16 %v373
        %v428 = vunpack.c.h.b16 %v373
        %v429 = vunpack.c.l.b16 %v374
        %v430 = vunpack.c.h.b16 %v374
        %v431 = vunpack.c.l.b16 %v375
        %v432 = vunpack.c.h.b16 %v375
        %v433 = vunpack.c.l.b16 %v376
        %v434 = vunpack.c.h.b16 %v376
        %v435 = vunpack.c.l.b16 %v377
        %v436 = vunpack.c.h.b16 %v377
        %v437 = vunpack.c.l.b16 %v378
        %v438 = vunpack.c.h.b16 %v378
        %v439 = vunpack.c.l.b16 %v379
        %v440 = vunpack.c.h.b16 %v379
        %v441 = vpack.c.b16 %v411, %v409
        %v442 = vpack.c.b16 %v412, %v410
        %v443 = vpack.c.b16 %v415, %v413
        %v444 = vpack.c.b16 %v416, %v414
        %v445 = vpack.c.b16 %v419, %v417
        %v446 = vpack.c.b16 %v420, %v418
        %v447 = vpack.c.b16 %v423, %v421
        %v448 = vpack.c.b16 %v424, %v422
        %v449 = vpack.c.b16 %v427, %v425
        %v450 = vpack.c.b16 %v428, %v426
        %v451 = vpack.c.b16 %v431, %v429
        %v452 = vpack.c.b16 %v432, %v430
        %v453 = vpack.c.b16 %v435, %v433
        %v454 = vpack.c.b16 %v436, %v434
        %v455 = vpack.c.b16 %v439, %v437
        %v456 = vpack.c.b16 %v440, %v438
        %473 = vmatprep.subr.bf16.mxu0 %v442
        %474 = vmatpush1.bf16.msra.mxu0 %v441
        %475 = vmatprep.subr.bf16.mxu0 %v444
        %476 = vmatpush1.bf16.msra.mxu0 %v443
        %477 = vmatprep.subr.bf16.mxu0 %v446
        %478 = vmatpush1.bf16.msra.mxu0 %v445
        %479 = vmatprep.subr.bf16.mxu0 %v448
        %480 = vmatpush1.bf16.msra.mxu0 %v447
        %481 = vmatprep.subr.bf16.mxu0 %v450
        %482 = vmatpush1.bf16.msra.mxu0 %v449
        %483 = vmatprep.subr.bf16.mxu0 %v452
        %484 = vmatpush1.bf16.msra.mxu0 %v451
        %485 = vmatprep.subr.bf16.mxu0 %v454
        %486 = vmatpush1.bf16.msra.mxu0 %v453
        %487 = vmatprep.subr.bf16.mxu0 %v456
        %488 = vmatpush1.bf16.msra.mxu0 %v455
        %489 = vmatprep.subr.bf16.mxu0 0
        %490 = vmatpush1.bf16.msra.mxu0 0
        %491 = vmatprep.subr.bf16.mxu0 0
        %492 = vmatpush1.bf16.msra.mxu0 0
        %493 = vmatprep.subr.bf16.mxu0 0
        %494 = vmatpush1.bf16.msra.mxu0 0
        %495 = vmatprep.subr.bf16.mxu0 0
        %496 = vmatpush1.bf16.msra.mxu0 0
        %497 = vmatprep.subr.bf16.mxu0 0
        %498 = vmatpush1.bf16.msra.mxu0 0
        %499 = vmatprep.subr.bf16.mxu0 0
        %500 = vmatpush1.bf16.msra.mxu0 0
        %501 = vmatprep.subr.bf16.mxu0 0
        %502 = vmatpush1.bf16.msra.mxu0 0
        %503 = vmatprep.subr.bf16.mxu0 0
        %504 = vmatpush1.bf16.msra.mxu0 0
        %505 = vmatprep.mubr.bf16.mxu0 0
        %506 = vmatmul.mubr.bf16.gmra.mrb[0].mxu0 %v362
        %v507 = vpop.f32.mrb[0].mxu0
        %v508 = vadd.f32 %v386, %v507
        %v509 = vpop.f32.mrb[0].mxu0
        %v510 = vadd.f32 %v390, %v509
        %v511 = vpop.f32.mrb[0].mxu0
        %v512 = vpop.f32.mrb[0].mxu0
        %513 = vdwg.mxu0
        %v514 = vmax.f32 %v508, 0.0
        %v515 = vsub.f32 0.0, %v510
        %v516 = vmul.f32 %v515, 1.442695
        %v517 = vpow.pop %v516
        %v518 = vadd.f32 %v517, 1.0
        %v519 = vrcp.pop %v518
        %v520 = vsub.f32 %v514, %v361
        %v521 = vmul.f32 %v519, %v520
        %v522 = vadd.f32 %v361, %v521
        %523 = vst [vmem:[%s200] sm:$0xff] %v522
        %s524 = sand.u32 %s97, 1
        %s525 = scalar_lea.sflag [#allocation4], %s524
        %s526 = sand.u32 %s97, 1
        %s527 = smul.addr %s526, 8
        %s528 = scalar_lea.vmem [#allocation7], %s527
        // Predicated region
        $region41: #{tpu_custom_call.1} parent=31 // pred_check
          %p529 = pneg %p107
        $region42: #{tpu_custom_call.1} parent=31 // pred_check_branch
          %531 = sbr.rel (%p529) target = $region44
        $region43: #{tpu_custom_call.1} parent=31 // pred_region
          %s533 = ssub.s32 128, 128
          %534 = vsyncadd %s525, %s533
          %s535 = smul.addr %s21, 128
          %s536 = scalar_lea.hbm %s3, %s535
          %s538 = sshll.u32 %s528, 4
          %s539 = int_to_ptr.vmem [resolvable:$true] %s538
          %541 = dma.vmem_to_hbm [thread:$0]  %s539, 128, %s536, %s525
        $region44: #{tpu_custom_call.1} parent=31 // pred_fallthru
          _
      $region32: #{tpu_custom_call.1} parent=5 // pred_fallthru
        _
      %p542 = scmp.le.s32.totalorder 2, %s16
      // Predicated region
      $region45: #{tpu_custom_call.1} parent=5 // pred_check
        %p543 = pneg %p542
      $region46: #{tpu_custom_call.1} parent=5 // pred_check_branch
        %545 = sbr.rel (%p543) target = $region48
      $region47: #{tpu_custom_call.1} parent=5 // pred_region
        %s546 = ssub.s32 %s16, 2
        // Predicated region
        $region49: #{tpu_custom_call.1} parent=47 // pred_check
          %p547 = pneg %p113
        $region50: #{tpu_custom_call.1} parent=47 // pred_check_branch
          %549 = sbr.rel (%p547) target = $region52
        $region51: #{tpu_custom_call.1} parent=47 // pred_region
          %s550 = sand.u32 %s98, 1
          %s551 = scalar_lea.sflag [#allocation4], %s550
          %s552 = sand.u32 %s98, 1
          %s553 = smul.addr %s552, 8
          %s554 = scalar_lea.vmem [#allocation7], %s553
          %555 = dma.done %s551, 128
        $region52: #{tpu_custom_call.1} parent=47 // pred_fallthru
          _
      $region48: #{tpu_custom_call.1} parent=5 // pred_fallthru
        _
    $region6: #{tpu_custom_call.1} parent=1 // loop_footer
      %s20 = sadd.s32 1, %s16
    $region7: #{tpu_custom_call.1} parent=1 // loop_footer_branch
      %15 = sbr.rel target = $region3
    $region8: #{tpu_custom_call.1} parent=1 // loop_exit
      _
    %556 = vsyncpa [#allocation3], 1
    %s557 = scalar_lea.sflag [#allocation3], 1
    %558 = vsyncpa %s557, 1
    %559 = vsyncpa [#allocation6], 1
    %560 = vsyncpa [#allocation4], 1
    %s561 = scalar_lea.sflag [#allocation4], 1
    %562 = vsyncpa %s561, 1

// kernel: tpu_custom_call.1
$region0: #{tpu_custom_call.1}
  #allocation0 [shape = 'u32[]', space=smem, size = 0x4, offset = 0x4, fixed_abs, tag = 'smem constant byte address 0x4 - core index']
  #allocation1 [shape = 'u32[144,128]{1,0:T(1,128)}', space=vmem, size = 0x12000, scoped, tag = 'internal scratch']
  %s0 = inlined_call_operand.hbm [shape: f32[16,128], index: 0, kind: input, shape index: {}]
  %s1 = inlined_call_operand.hbm [shape: bf16[2,128,256], index: 1, kind: input, shape index: {}]
  %s2 = inlined_call_operand.vmem [shape: f32[2,1,256], index: 2, kind: input, shape index: {}]
  %s3 = inlined_call_operand.hbm [shape: f32[16,128], index: 3, kind: output, shape index: {}]
  %s4 = sld [smem:[#allocation0]]
  $region53: #{tpu_custom_call.1} parent=0
    _
  %s6 = ssub.s32 1, %s4
  %s7 = scalar_select 0, %s6, %s4
  $region1: #{tpu_custom_call.1} parent=0
    #allocation2 [shape = 'u8[8192]{0}', space=vmem, size = 0x2000, scoped, tag = 'input window, operand 0']
    #allocation3 [shape = 's32[2]{0}', space=sflag, size = 0x8, scoped, tag = 'scoped memory for tpu_custom_call.1']
    #allocation4 [shape = 's32[2]{0}', space=sflag, size = 0x8, scoped, tag = 'scoped memory for tpu_custom_call.1']
    #allocation5 [shape = 'u8[131072]{0}', space=vmem, size = 0x20000, scoped, tag = 'input window, operand 1, single buffered']
    #allocation6 [shape = 's32[1]{0}', space=sflag, size = 0x4, scoped, tag = 'scoped memory for tpu_custom_call.1']
    #allocation7 [shape = 'u8[8192]{0}', space=vmem, size = 0x2000, scoped, tag = 'output window, operand 0']
    %8 = vsyncpa [#allocation3], 0
    %s9 = scalar_lea.sflag [#allocation3], 1
    %10 = vsyncpa %s9, 0
    %11 = vsyncpa [#allocation6], 0
    %12 = vsyncpa [#allocation4], 0
    %s13 = scalar_lea.sflag [#allocation4], 1
    %14 = vsyncpa %s13, 0
    loop: start=0, step=1, limit=4
    $region2: #{tpu_custom_call.1} parent=1 // loop_pre_header
      _
    $region3: #{tpu_custom_call.1} parent=1 // loop_header
      %s16 = sphi 0, %s20
      %p17 = scmp.ge.s32.totalorder %s16, 4
      %s26 = sphi 0, %s28
      %s29 = sphi 0, %s26
      %s30 = sphi 0, %s29
      %s46 = sphi 0, %s30
      %s50 = sphi 0, %s50
      %s52 = sphi 0, %s50
      %s53 = sphi 0, %s52
      %s67 = sphi 0, %s53
      %s71 = sphi 0, %s71
      %s73 = sphi 0, %s71
      %s74 = sphi 0, %s73
      %s88 = sphi 0, %s74
      %s94 = sphi 0, %s96
      %s97 = sphi 0, %s94
      %s98 = sphi 0, %s97
      %s114 = sphi 0, %s98
    $region4: #{tpu_custom_call.1} parent=1 // loop_header_branch
      %19 = sbr.rel (%p17) target = $region8
    $region5: #{tpu_custom_call.1} parent=1 // loop_body
      %s21 = ssub.s32 %s16, 1
      %s22 = ssub.s32 %s16, 2
      %s23 = sadd.s32 %s16, 1
      %s24 = ssub.s32 %s16, %s23
      %p25 = scmp.eq.s32.totalorder %s24, 0
      %s27 = sadd.s32 %s26, 1
      %s28 = scalar_select %p25, %s26, %s27
      %p31 = pneg %p25
      %p32 = scmp.eq.s32.totalorder %s16, 1
      %p33 = por %p31, %p32
      %p34 = scmp.ne.s32.totalorder %s26, %s29
      %p35 = scmp.eq.s32.totalorder %s16, 0
      %p36 = por %p34, %p35
      %p37 = scmp.ne.s32.totalorder %s26, %s29
      %p38 = scmp.eq.s32.totalorder %s21, 1
      %p39 = por %p37, %p38
      %p40 = scmp.ne.s32.totalorder %s29, %s30
      %p41 = scmp.eq.s32.totalorder %s21, 0
      %p42 = por %p40, %p41
      %p43 = scmp.ne.s32.totalorder %s29, %s30
      %p44 = scmp.eq.s32.totalorder %s22, 1
      %p45 = por %p43, %p44
      %p47 = scmp.ne.s32.totalorder %s30, %s46
      %p48 = scmp.eq.s32.totalorder %s22, 0
      %p49 = por %p47, %p48
      %s51 = sadd.s32 %s50, 1
      %p54 = scmp.eq.s32.totalorder %s16, 1
      %p55 = scmp.ne.s32.totalorder %s50, %s52
      %p56 = scmp.eq.s32.totalorder %s16, 0
      %p57 = por %p55, %p56
      %p58 = scmp.ne.s32.totalorder %s50, %s52
      %p59 = scmp.eq.s32.totalorder %s21, 1
      %p60 = por %p58, %p59
      %p61 = scmp.ne.s32.totalorder %s52, %s53
      %p62 = scmp.eq.s32.totalorder %s21, 0
      %p63 = por %p61, %p62
      %p64 = scmp.ne.s32.totalorder %s52, %s53
      %p65 = scmp.eq.s32.totalorder %s22, 1
      %p66 = por %p64, %p65
      %p68 = scmp.ne.s32.totalorder %s53, %s67
      %p69 = scmp.eq.s32.totalorder %s22, 0
      %p70 = por %p68, %p69
      %s72 = sadd.s32 %s71, 1
      %p75 = scmp.eq.s32.totalorder %s16, 1
      %p76 = scmp.ne.s32.totalorder %s71, %s73
      %p77 = scmp.eq.s32.totalorder %s16, 0
      %p78 = por %p76, %p77
      %p79 = scmp.ne.s32.totalorder %s71, %s73
      %p80 = scmp.eq.s32.totalorder %s21, 1
      %p81 = por %p79, %p80
      %p82 = scmp.ne.s32.totalorder %s73, %s74
      %p83 = scmp.eq.s32.totalorder %s21, 0
      %p84 = por %p82, %p83
      %p85 = scmp.ne.s32.totalorder %s73, %s74
      %p86 = scmp.eq.s32.totalorder %s22, 1
      %p87 = por %p85, %p86
      %p89 = scmp.ne.s32.totalorder %s74, %s88
      %p90 = scmp.eq.s32.totalorder %s22, 0
      %p91 = por %p89, %p90
      %s92 = ssub.s32 %s16, %s23
      %p93 = scmp.eq.s32.totalorder %s92, 0
      %s95 = sadd.s32 %s94, 1
      %s96 = scalar_select %p93, %s94, %s95
      %p99 = pneg %p93
      %p100 = scmp.eq.s32.totalorder %s16, 1
      %p101 = por %p99, %p100
      %p102 = scmp.ne.s32.totalorder %s94, %s97
      %p103 = scmp.eq.s32.totalorder %s16, 0
      %p104 = por %p102, %p103
      %p105 = scmp.ne.s32.totalorder %s94, %s97
      %p106 = scmp.eq.s32.totalorder %s21, 1
      %p107 = por %p105, %p106
      %p108 = scmp.ne.s32.totalorder %s97, %s98
      %p109 = scmp.eq.s32.totalorder %s21, 0
      %p110 = por %p108, %p109
      %p111 = scmp.ne.s32.totalorder %s97, %s98
      %p112 = scmp.eq.s32.totalorder %s22, 1
      %p113 = por %p111, %p112
      %p115 = scmp.ne.s32.totalorder %s98, %s114
      %p116 = scmp.eq.s32.totalorder %s22, 0
      %p117 = por %p115, %p116
      %p118 = scmp.le.s32.totalorder 1, %s16
      %p119 = scmp.lt.s32.totalorder %s16, 3
      %p120 = pnand %p118, %p119
      %p121 = pneg %p120
      // Predicated region
      $region9: #{tpu_custom_call.1} parent=5 // pred_check
        _
      $region10: #{tpu_custom_call.1} parent=5 // pred_check_branch
        %123 = sbr.rel (%p120) target = $region12
      $region11: #{tpu_custom_call.1} parent=5 // pred_region
        %s124 = ssub.s32 %s16, 1
        // Predicated region
        $region13: #{tpu_custom_call.1} parent=11 // pred_check
          %p125 = pneg %p63
        $region14: #{tpu_custom_call.1} parent=11 // pred_check_branch
          %127 = sbr.rel (%p125) target = $region16
        $region15: #{tpu_custom_call.1} parent=11 // pred_region
          %s129 = ssub.s32 4096, 4096
          %130 = vsyncadd [#allocation6], %s129
          %s131 = sshll.u32 [#allocation5], 4
          %s132 = int_to_ptr.vmem [resolvable:$true] %s131
          %137 = dma.hbm_to_vmem [thread:$0]  %s1, 4096, %s132, [#allocation6], 128, 128, 8
        $region16: #{tpu_custom_call.1} parent=11 // pred_fallthru
          _
        // Predicated region
        $region17: #{tpu_custom_call.1} parent=11 // pred_check
          %p138 = pneg %p84
        $region18: #{tpu_custom_call.1} parent=11 // pred_check_branch
          %140 = sbr.rel (%p138) target = $region20
        $region19: #{tpu_custom_call.1} parent=11 // pred_region
          _
        $region20: #{tpu_custom_call.1} parent=11 // pred_fallthru
          _
      $region12: #{tpu_custom_call.1} parent=5 // pred_fallthru
        _
      %p141 = scmp.lt.s32.totalorder %s16, 2
      // Predicated region
      $region21: #{tpu_custom_call.1} parent=5 // pred_check
        %p142 = pneg %p141
      $region22: #{tpu_custom_call.1} parent=5 // pred_check_branch
        %144 = sbr.rel (%p142) target = $region24
      $region23: #{tpu_custom_call.1} parent=5 // pred_region
        // Predicated region
        $region25: #{tpu_custom_call.1} parent=23 // pred_check
          %p145 = pneg %p36
        $region26: #{tpu_custom_call.1} parent=23 // pred_check_branch
          %147 = sbr.rel (%p145) target = $region28
        $region27: #{tpu_custom_call.1} parent=23 // pred_region
          %s148 = sand.u32 %s26, 1
          %s149 = scalar_lea.sflag [#allocation3], %s148
          %s150 = sand.u32 %s26, 1
          %s151 = smul.addr %s150, 8
          %s152 = scalar_lea.vmem [#allocation2], %s151
          %s154 = ssub.s32 128, 128
          %155 = vsyncadd %s149, %s154
          %s156 = smul.addr %s16, 128
          %s157 = scalar_lea.hbm %s0, %s156
          %s159 = sshll.u32 %s152, 4
          %s160 = int_to_ptr.vmem [resolvable:$true] %s159
          %162 = dma.hbm_to_vmem [thread:$0]  %s157, 128, %s160, %s149
        $region28: #{tpu_custom_call.1} parent=23 // pred_fallthru
          _
      $region24: #{tpu_custom_call.1} parent=5 // pred_fallthru
        _
      %p163 = scmp.le.s32.totalorder 1, %s16
      %p164 = scmp.lt.s32.totalorder %s16, 3
      %p165 = pnand %p163, %p164
      %p166 = pneg %p165
      // Predicated region
      $region29: #{tpu_custom_call.1} parent=5 // pred_check
        _
      $region30: #{tpu_custom_call.1} parent=5 // pred_check_branch
        %168 = sbr.rel (%p165) target = $region32
      $region31: #{tpu_custom_call.1} parent=5 // pred_region
        %s169 = ssub.s32 %s16, 1
        %s170 = sand.u32 %s29, 1
        %s171 = scalar_lea.sflag [#allocation3], %s170
        %s172 = sand.u32 %s29, 1
        %s173 = smul.addr %s172, 8
        %s174 = scalar_lea.vmem [#allocation2], %s173
        // Predicated region
        $region33: #{tpu_custom_call.1} parent=31 // pred_check
          %p175 = pneg %p42
        $region34: #{tpu_custom_call.1} parent=31 // pred_check_branch
          %177 = sbr.rel (%p175) target = $region36
        $region35: #{tpu_custom_call.1} parent=31 // pred_region
          %178 = dma.done %s171, 128
        $region36: #{tpu_custom_call.1} parent=31 // pred_fallthru
          _
        // Predicated region
        $region37: #{tpu_custom_call.1} parent=31 // pred_check
          %p179 = pneg %p63
        $region38: #{tpu_custom_call.1} parent=31 // pred_check_branch
          %181 = sbr.rel (%p179) target = $region40
        $region39: #{tpu_custom_call.1} parent=31 // pred_region
          %182 = dma.done [#allocation6], 4096
        $region40: #{tpu_custom_call.1} parent=31 // pred_fallthru
          _
        %s183 = sand.u32 %s29, 1
        %s184 = scalar_lea.sflag [#allocation3], %s183
        %s185 = sand.u32 %s29, 1
        %s186 = smul.addr %s185, 8
        %s187 = scalar_lea.vmem [#allocation2], %s186
        %p188 = pneg %p42
        %p189 = pneg %p39
        %p190 = pneg %p63
        %p191 = pneg %p60
        %p192 = pneg %p84
        %p193 = pneg %p81
        %p194 = pneg %p110
        %p195 = pneg %p107
        %s196 = sand.u32 %s97, 1
        %s197 = scalar_lea.sflag [#allocation4], %s196
        %s198 = sand.u32 %s97, 1
        %s199 = smul.addr %s198, 8
        %s200 = scalar_lea.vmem [#allocation7], %s199
        %v202 = vld [vmem:[%s174] sm:$0xff]
        %v203 = vpack.c.bf16 %v202, %v202
        %v204 = vld [vmem:[#allocation5] sm:$0xff]
        %v205 = vld [vmem:[#allocation5 + $0x8] sm:$0xff]
        %v206 = vld [vmem:[#allocation5 + $0x10] sm:$0xff]
        %v207 = vld [vmem:[#allocation5 + $0x18] sm:$0xff]
        %v208 = vld [vmem:[#allocation5 + $0x20] sm:$0xff]
        %v209 = vld [vmem:[#allocation5 + $0x28] sm:$0xff]
        %v210 = vld [vmem:[#allocation5 + $0x30] sm:$0xff]
        %v211 = vld [vmem:[#allocation5 + $0x38] sm:$0xff]
        %v212 = vld [vmem:[#allocation5 + $0x40] sm:$0xff]
        %v213 = vld [vmem:[#allocation5 + $0x48] sm:$0xff]
        %v214 = vld [vmem:[#allocation5 + $0x50] sm:$0xff]
        %v215 = vld [vmem:[#allocation5 + $0x58] sm:$0xff]
        %v216 = vld [vmem:[#allocation5 + $0x60] sm:$0xff]
        %v217 = vld [vmem:[#allocation5 + $0x68] sm:$0xff]
        %v218 = vld [vmem:[#allocation5 + $0x70] sm:$0xff]
        %v219 = vld [vmem:[#allocation5 + $0x78] sm:$0xff]
        %v220 = vld [vmem:[%s2] sm:$0x3]
        %v222 = vlaneseq
        %v223 = vshrl.u32 %v222, 7
        %v224 = vsub.s32 0, %v223
        %v225 = vrot.slane %v220, %v224
        %v226 = vlaneseq
        %v227 = vshrl.u32 %v226, 7
        %v228 = vsub.s32 1, %v227
        %v229 = vrot.slane %v220, %v228
        %v248 = vunpack.c.l.b16 %v204
        %v249 = vunpack.c.h.b16 %v204
        %v250 = vunpack.c.l.b16 %v205
        %v251 = vunpack.c.h.b16 %v205
        %v252 = vunpack.c.l.b16 %v206
        %v253 = vunpack.c.h.b16 %v206
        %v254 = vunpack.c.l.b16 %v207
        %v255 = vunpack.c.h.b16 %v207
        %v256 = vunpack.c.l.b16 %v208
        %v257 = vunpack.c.h.b16 %v208
        %v258 = vunpack.c.l.b16 %v209
        %v259 = vunpack.c.h.b16 %v209
        %v260 = vunpack.c.l.b16 %v210
        %v261 = vunpack.c.h.b16 %v210
        %v262 = vunpack.c.l.b16 %v211
        %v263 = vunpack.c.h.b16 %v211
        %v264 = vunpack.c.l.b16 %v212
        %v265 = vunpack.c.h.b16 %v212
        %v266 = vunpack.c.l.b16 %v213
        %v267 = vunpack.c.h.b16 %v213
        %v268 = vunpack.c.l.b16 %v214
        %v269 = vunpack.c.h.b16 %v214
        %v270 = vunpack.c.l.b16 %v215
        %v271 = vunpack.c.h.b16 %v215
        %v272 = vunpack.c.l.b16 %v216
        %v273 = vunpack.c.h.b16 %v216
        %v274 = vunpack.c.l.b16 %v217
        %v275 = vunpack.c.h.b16 %v217
        %v276 = vunpack.c.l.b16 %v218
        %v277 = vunpack.c.h.b16 %v218
        %v278 = vunpack.c.l.b16 %v219
        %v279 = vunpack.c.h.b16 %v219
        %v280 = vpack.c.b16 %v250, %v248
        %v281 = vpack.c.b16 %v251, %v249
        %v282 = vpack.c.b16 %v254, %v252
        %v283 = vpack.c.b16 %v255, %v253
        %v284 = vpack.c.b16 %v258, %v256
        %v285 = vpack.c.b16 %v259, %v257
        %v286 = vpack.c.b16 %v262, %v260
        %v287 = vpack.c.b16 %v263, %v261
        %v288 = vpack.c.b16 %v266, %v264
        %v289 = vpack.c.b16 %v267, %v265
        %v290 = vpack.c.b16 %v270, %v268
        %v291 = vpack.c.b16 %v271, %v269
        %v292 = vpack.c.b16 %v274, %v272
        %v293 = vpack.c.b16 %v275, %v273
        %v294 = vpack.c.b16 %v278, %v276
        %v295 = vpack.c.b16 %v279, %v277
        %312 = vmatprep.subr.bf16.mxu0 %v281
        %313 = vmatpush1.bf16.msra.mxu0 %v280
        %314 = vmatprep.subr.bf16.mxu0 %v283
        %315 = vmatpush1.bf16.msra.mxu0 %v282
        %316 = vmatprep.subr.bf16.mxu0 %v285
        %317 = vmatpush1.bf16.msra.mxu0 %v284
        %318 = vmatprep.subr.bf16.mxu0 %v287
        %319 = vmatpush1.bf16.msra.mxu0 %v286
        %320 = vmatprep.subr.bf16.mxu0 %v289
        %321 = vmatpush1.bf16.msra.mxu0 %v288
        %322 = vmatprep.subr.bf16.mxu0 %v291
        %323 = vmatpush1.bf16.msra.mxu0 %v290
        %324 = vmatprep.subr.bf16.mxu0 %v293
        %325 = vmatpush1.bf16.msra.mxu0 %v292
        %326 = vmatprep.subr.bf16.mxu0 %v295
        %327 = vmatpush1.bf16.msra.mxu0 %v294
        %328 = vmatprep.subr.bf16.mxu0 0
        %329 = vmatpush1.bf16.msra.mxu0 0
        %330 = vmatprep.subr.bf16.mxu0 0
        %331 = vmatpush1.bf16.msra.mxu0 0
        %332 = vmatprep.subr.bf16.mxu0 0
        %333 = vmatpush1.bf16.msra.mxu0 0
        %334 = vmatprep.subr.bf16.mxu0 0
        %335 = vmatpush1.bf16.msra.mxu0 0
        %336 = vmatprep.subr.bf16.mxu0 0
        %337 = vmatpush1.bf16.msra.mxu0 0
        %338 = vmatprep.subr.bf16.mxu0 0
        %339 = vmatpush1.bf16.msra.mxu0 0
        %340 = vmatprep.subr.bf16.mxu0 0
        %341 = vmatpush1.bf16.msra.mxu0 0
        %342 = vmatprep.subr.bf16.mxu0 0
        %343 = vmatpush1.bf16.msra.mxu0 0
        %344 = vmatprep.mubr.bf16.mxu0 0
        %345 = vmatmul.mubr.bf16.gmra.mrb[0].mxu0 %v203
        %v346 = vpop.f32.mrb[0].mxu0
        %v347 = vadd.f32 %v225, %v346
        %v348 = vpop.f32.mrb[0].mxu0
        %v349 = vadd.f32 %v229, %v348
        %v350 = vpop.f32.mrb[0].mxu0
        %v351 = vpop.f32.mrb[0].mxu0
        %352 = vdwg.mxu0
        %v353 = vmax.f32 %v347, 0.0
        %v354 = vsub.f32 0.0, %v349
        %v355 = vmul.f32 %v354, 1.442695
        %v356 = vpow.pop %v355
        %v357 = vadd.f32 %v356, 1.0
        %v358 = vrcp.pop %v357
        %v359 = vsub.f32 %v353, %v202
        %v360 = vmul.f32 %v358, %v359
        %v361 = vadd.f32 %v202, %v360
        %v362 = vpack.c.bf16 %v361, %v361
        %s363 = scalar_lea.vmem [#allocation5], 128
        %v364 = vld [vmem:[%s363] sm:$0xff]
        %v365 = vld [vmem:[%s363 + $0x8] sm:$0xff]
        %v366 = vld [vmem:[%s363 + $0x10] sm:$0xff]
        %v367 = vld [vmem:[%s363 + $0x18] sm:$0xff]
        %v368 = vld [vmem:[%s363 + $0x20] sm:$0xff]
        %v369 = vld [vmem:[%s363 + $0x28] sm:$0xff]
        %v370 = vld [vmem:[%s363 + $0x30] sm:$0xff]
        %v371 = vld [vmem:[%s363 + $0x38] sm:$0xff]
        %v372 = vld [vmem:[%s363 + $0x40] sm:$0xff]
        %v373 = vld [vmem:[%s363 + $0x48] sm:$0xff]
        %v374 = vld [vmem:[%s363 + $0x50] sm:$0xff]
        %v375 = vld [vmem:[%s363 + $0x58] sm:$0xff]
        %v376 = vld [vmem:[%s363 + $0x60] sm:$0xff]
        %v377 = vld [vmem:[%s363 + $0x68] sm:$0xff]
        %v378 = vld [vmem:[%s363 + $0x70] sm:$0xff]
        %v379 = vld [vmem:[%s363 + $0x78] sm:$0xff]
        %s380 = scalar_lea.vmem %s2, 2
        %v381 = vld [vmem:[%s380] sm:$0x3]
        %v383 = vlaneseq
        %v384 = vshrl.u32 %v383, 7
        %v385 = vsub.s32 0, %v384
        %v386 = vrot.slane %v381, %v385
        %v387 = vlaneseq
        %v388 = vshrl.u32 %v387, 7
        %v389 = vsub.s32 1, %v388
        %v390 = vrot.slane %v381, %v389
        %v409 = vunpack.c.l.b16 %v364
        %v410 = vunpack.c.h.b16 %v364
        %v411 = vunpack.c.l.b16 %v365
        %v412 = vunpack.c.h.b16 %v365
        %v413 = vunpack.c.l.b16 %v366
        %v414 = vunpack.c.h.b16 %v366
        %v415 = vunpack.c.l.b16 %v367
        %v416 = vunpack.c.h.b16 %v367
        %v417 = vunpack.c.l.b16 %v368
        %v418 = vunpack.c.h.b16 %v368
        %v419 = vunpack.c.l.b16 %v369
        %v420 = vunpack.c.h.b16 %v369
        %v421 = vunpack.c.l.b16 %v370
        %v422 = vunpack.c.h.b16 %v370
        %v423 = vunpack.c.l.b16 %v371
        %v424 = vunpack.c.h.b16 %v371
        %v425 = vunpack.c.l.b16 %v372
        %v426 = vunpack.c.h.b16 %v372
        %v427 = vunpack.c.l.b16 %v373
        %v428 = vunpack.c.h.b16 %v373
        %v429 = vunpack.c.l.b16 %v374
        %v430 = vunpack.c.h.b16 %v374
        %v431 = vunpack.c.l.b16 %v375
        %v432 = vunpack.c.h.b16 %v375
        %v433 = vunpack.c.l.b16 %v376
        %v434 = vunpack.c.h.b16 %v376
        %v435 = vunpack.c.l.b16 %v377
        %v436 = vunpack.c.h.b16 %v377
        %v437 = vunpack.c.l.b16 %v378
        %v438 = vunpack.c.h.b16 %v378
        %v439 = vunpack.c.l.b16 %v379
        %v440 = vunpack.c.h.b16 %v379
        %v441 = vpack.c.b16 %v411, %v409
        %v442 = vpack.c.b16 %v412, %v410
        %v443 = vpack.c.b16 %v415, %v413
        %v444 = vpack.c.b16 %v416, %v414
        %v445 = vpack.c.b16 %v419, %v417
        %v446 = vpack.c.b16 %v420, %v418
        %v447 = vpack.c.b16 %v423, %v421
        %v448 = vpack.c.b16 %v424, %v422
        %v449 = vpack.c.b16 %v427, %v425
        %v450 = vpack.c.b16 %v428, %v426
        %v451 = vpack.c.b16 %v431, %v429
        %v452 = vpack.c.b16 %v432, %v430
        %v453 = vpack.c.b16 %v435, %v433
        %v454 = vpack.c.b16 %v436, %v434
        %v455 = vpack.c.b16 %v439, %v437
        %v456 = vpack.c.b16 %v440, %v438
        %473 = vmatprep.subr.bf16.mxu0 %v442
        %474 = vmatpush1.bf16.msra.mxu0 %v441
        %475 = vmatprep.subr.bf16.mxu0 %v444
        %476 = vmatpush1.bf16.msra.mxu0 %v443
        %477 = vmatprep.subr.bf16.mxu0 %v446
        %478 = vmatpush1.bf16.msra.mxu0 %v445
        %479 = vmatprep.subr.bf16.mxu0 %v448
        %480 = vmatpush1.bf16.msra.mxu0 %v447
        %481 = vmatprep.subr.bf16.mxu0 %v450
        %482 = vmatpush1.bf16.msra.mxu0 %v449
        %483 = vmatprep.subr.bf16.mxu0 %v452
        %484 = vmatpush1.bf16.msra.mxu0 %v451
        %485 = vmatprep.subr.bf16.mxu0 %v454
        %486 = vmatpush1.bf16.msra.mxu0 %v453
        %487 = vmatprep.subr.bf16.mxu0 %v456
        %488 = vmatpush1.bf16.msra.mxu0 %v455
        %489 = vmatprep.subr.bf16.mxu0 0
        %490 = vmatpush1.bf16.msra.mxu0 0
        %491 = vmatprep.subr.bf16.mxu0 0
        %492 = vmatpush1.bf16.msra.mxu0 0
        %493 = vmatprep.subr.bf16.mxu0 0
        %494 = vmatpush1.bf16.msra.mxu0 0
        %495 = vmatprep.subr.bf16.mxu0 0
        %496 = vmatpush1.bf16.msra.mxu0 0
        %497 = vmatprep.subr.bf16.mxu0 0
        %498 = vmatpush1.bf16.msra.mxu0 0
        %499 = vmatprep.subr.bf16.mxu0 0
        %500 = vmatpush1.bf16.msra.mxu0 0
        %501 = vmatprep.subr.bf16.mxu0 0
        %502 = vmatpush1.bf16.msra.mxu0 0
        %503 = vmatprep.subr.bf16.mxu0 0
        %504 = vmatpush1.bf16.msra.mxu0 0
        %505 = vmatprep.mubr.bf16.mxu0 0
        %506 = vmatmul.mubr.bf16.gmra.mrb[0].mxu0 %v362
        %v507 = vpop.f32.mrb[0].mxu0
        %v508 = vadd.f32 %v386, %v507
        %v509 = vpop.f32.mrb[0].mxu0
        %v510 = vadd.f32 %v390, %v509
        %v511 = vpop.f32.mrb[0].mxu0
        %v512 = vpop.f32.mrb[0].mxu0
        %513 = vdwg.mxu0
        %v514 = vmax.f32 %v508, 0.0
        %v515 = vsub.f32 0.0, %v510
        %v516 = vmul.f32 %v515, 1.442695
        %v517 = vpow.pop %v516
        %v518 = vadd.f32 %v517, 1.0
        %v519 = vrcp.pop %v518
        %v520 = vsub.f32 %v514, %v361
        %v521 = vmul.f32 %v519, %v520
        %v522 = vadd.f32 %v361, %v521
        %523 = vst [vmem:[%s200] sm:$0xff] %v522
        %s524 = sand.u32 %s97, 1
        %s525 = scalar_lea.sflag [#allocation4], %s524
        %s526 = sand.u32 %s97, 1
        %s527 = smul.addr %s526, 8
        %s528 = scalar_lea.vmem [#allocation7], %s527
        // Predicated region
        $region41: #{tpu_custom_call.1} parent=31 // pred_check
          %p529 = pneg %p107
        $region42: #{tpu_custom_call.1} parent=31 // pred_check_branch
          %531 = sbr.rel (%p529) target = $region44
        $region43: #{tpu_custom_call.1} parent=31 // pred_region
          %s533 = ssub.s32 128, 128
          %534 = vsyncadd %s525, %s533
          %s535 = smul.addr %s21, 128
          %s536 = scalar_lea.hbm %s3, %s535
          %s538 = sshll.u32 %s528, 4
          %s539 = int_to_ptr.vmem [resolvable:$true] %s538
          %541 = dma.vmem_to_hbm [thread:$0]  %s539, 128, %s536, %s525
        $region44: #{tpu_custom_call.1} parent=31 // pred_fallthru
          _
      $region32: #{tpu_custom_call.1} parent=5 // pred_fallthru
        _
      %p542 = scmp.le.s32.totalorder 2, %s16
      // Predicated region
      $region45: #{tpu_custom_call.1} parent=5 // pred_check
        %p543 = pneg %p542
      $region46: #{tpu_custom_call.1} parent=5 // pred_check_branch
        %545 = sbr.rel (%p543) target = $region48
      $region47: #{tpu_custom_call.1} parent=5 // pred_region
        %s546 = ssub.s32 %s16, 2
        // Predicated region
        $region49: #{tpu_custom_call.1} parent=47 // pred_check
          %p547 = pneg %p113
        $region50: #{tpu_custom_call.1} parent=47 // pred_check_branch
          %549 = sbr.rel (%p547) target = $region52
        $region51: #{tpu_custom_call.1} parent=47 // pred_region
          %s550 = sand.u32 %s98, 1
          %s551 = scalar_lea.sflag [#allocation4], %s550
          %s552 = sand.u32 %s98, 1
          %s553 = smul.addr %s552, 8
          %s554 = scalar_lea.vmem [#allocation7], %s553
          %555 = dma.done %s551, 128
        $region52: #{tpu_custom_call.1} parent=47 // pred_fallthru
          _
      $region48: #{tpu_custom_call.1} parent=5 // pred_fallthru
        _
    $region6: #{tpu_custom_call.1} parent=1 // loop_footer
      %s20 = sadd.s32 1, %s16
    $region7: #{tpu_custom_call.1} parent=1 // loop_footer_branch
      %15 = sbr.rel target = $region3
    $region8: #{tpu_custom_call.1} parent=1 // loop_exit
      _
    %556 = vsyncpa [#allocation3], 1
    %s557 = scalar_lea.sflag [#allocation3], 1
    %558 = vsyncpa %s557, 1
    %559 = vsyncpa [#allocation6], 1
    %560 = vsyncpa [#allocation4], 1
    %s561 = scalar_lea.sflag [#allocation4], 1
    %562 = vsyncpa %s561, 1

</llo_original>
